<compile_context>
chip_gen: v7x
topology: tpu7x:2x2x1
jax: 0.10.0
libtpu: 0.0.40
codegen_flags: <defaults>
</compile_context>

<pallas_src>
import functools

import jax
import jax.numpy as jnp
from jax.experimental import pallas as pl
from jax.experimental.pallas import tpu as pltpu


# ---------------------------------------------------------------------------
# Kernels
# ---------------------------------------------------------------------------

def ffn_kernel_resident(x_ref, w1_ref, b1_ref, w2_ref, b2_ref, o_ref):
    """Fast path: both weights resident, single d_ff step, no accumulator."""
    x = x_ref[...].astype(w1_ref.dtype)                      # in-kernel cast
    h = jnp.dot(x, w1_ref[...], preferred_element_type=jnp.float32)
    h = jnp.maximum(h + b1_ref[...], 0.0)
    # dropout: identity (eval mode)
    y = jnp.dot(h.astype(w2_ref.dtype), w2_ref[...],
                preferred_element_type=jnp.float32)
    o_ref[...] = (y + b2_ref[...]).astype(o_ref.dtype)


def ffn_kernel_tiled(x_ref, w1_ref, b1_ref, w2_ref, b2_ref, o_ref, acc_ref):
    """d_ff tiled over grid axis 1 with an f32 VMEM accumulator."""
    k = pl.program_id(1)

    x = x_ref[...].astype(w1_ref.dtype)
    h = jnp.dot(x, w1_ref[...], preferred_element_type=jnp.float32)
    h = jnp.maximum(h + b1_ref[...], 0.0)
    # dropout: identity (eval mode)
    part = jnp.dot(h.astype(w2_ref.dtype), w2_ref[...],
                   preferred_element_type=jnp.float32)

    @pl.when(k == 0)
    def _first():
        acc_ref[...] = part                   # direct write (no zero + RMW)

    @pl.when(k > 0)
    def _accumulate():
        acc_ref[...] += part

    @pl.when(k == pl.num_programs(1) - 1)
    def _finalize():
        o_ref[...] = (acc_ref[...] + b2_ref[...]).astype(o_ref.dtype)


# ---------------------------------------------------------------------------
# Parameter prep & helpers
# ---------------------------------------------------------------------------

def prepare_params(w1, b1, w2, b2, compute_dtype=jnp.bfloat16):
    """One-time layout/dtype prep (call once at init, NOT per forward):
    transpose weights into MXU-native (K, N) layout and cast to the compute
    dtype; keep biases in f32 so bias-add stays in f32 inside the kernel."""
    w1_t = jnp.asarray(w1.T, dtype=compute_dtype)              # (hidden_size, hidden)
    w2_t = jnp.asarray(w2.T, dtype=compute_dtype)              # (hidden, hidden_size)
    b1_2d = jnp.asarray(b1, dtype=jnp.float32).reshape(1, -1)  # (1, hidden)
    b2_2d = jnp.asarray(b2, dtype=jnp.float32).reshape(1, -1)  # (1, hidden_size)
    return w1_t, b1_2d, w2_t, b2_2d


def _round_up(x, m):
    return (x + m - 1) // m * m


def _sublane(dtype):
    # rows per vreg: 8 for 4-byte, 16 for 2-byte, 32 for 1-byte dtypes
    return max(8, 32 // jnp.dtype(dtype).itemsize)


def _vmem_budget_bytes():
    """Generation-aware scoped-VMEM budget (headroom for compiler scratch)."""
    try:
        cap = pltpu.get_tpu_info().vmem_capacity_bytes
    except Exception:
        cap = 64 << 20                   # conservative fallback (v7x per-TC)
    return int(cap * 0.8)                # ~51 MiB v7x, ~102 MiB v5e/v6e


# ---------------------------------------------------------------------------
# Wrapper
# ---------------------------------------------------------------------------

@functools.partial(jax.jit, static_argnames=("tile_m", "block_ff"))
def positionwise_ffn(x, w1_t, b1_2d, w2_t, b2_2d, tile_m=None, block_ff=None):
    """x: [batch, seq, hidden_size]; weights from prepare_params:
    w1_t: [hidden_size, hidden], w2_t: [hidden, hidden_size], biases f32 2-D."""
    batch, seq, hidden_size = x.shape
    hidden = w1_t.shape[1]
    out_dtype = x.dtype
    w_dtype = w1_t.dtype
    x_isz = jnp.dtype(x.dtype).itemsize
    w_isz = jnp.dtype(w_dtype).itemsize
    o_isz = jnp.dtype(out_dtype).itemsize

    M = batch * seq
    x2d = x.reshape(M, hidden_size)      # no pad, no host-side cast

    budget = _vmem_budget_bytes()
    sublane = max(_sublane(x.dtype), _sublane(w_dtype))

    # ---- row tile -----------------------------------------------------------
    if tile_m is None:
        tm_target = 1024 if budget >= (96 << 20) else 512
    else:
        tm_target = tile_m
    tm = _round_up(min(tm_target, _round_up(M, sublane)), sublane)

    def _row_tile_bytes(tm_, tf_, tiled):
        b = 2 * tm_ * hidden_size * x_isz            # x tile (double-buffered)
        b += 2 * tm_ * hidden_size * o_isz           # out tile
        b += tm_ * tf_ * 4                           # h intermediate (f32)
        if tiled:
            b += tm_ * hidden_size * 4               # accumulator scratch
        return b

    def _weight_bytes(tf_):
        # BlockSpec double-buffers every input, weights included.
        return (2 * (hidden_size * tf_ + tf_ * hidden_size) * w_isz
                + 2 * (tf_ + hidden_size) * 4)

    # ---- d_ff tile ----------------------------------------------------------
    if block_ff is not None:
        tf = block_ff
    else:
        tf = None
        # Prefer the resident-weights (K==1) regime; shrink the row tile
        # (not below 256) before giving up residency.
        for tm_try in sorted({tm, min(tm, 512), min(tm, 256)}, reverse=True):
            if _weight_bytes(hidden) + _row_tile_bytes(tm_try, hidden, False) <= budget:
                tf, tm = hidden, tm_try
                break
        if tf is None:
            # Tile d_ff in 128-aligned chunks that divide `hidden`.
            for cand in (2048, 1024, 512, 256, 128):
                if cand < hidden and hidden % cand == 0:
                    if _weight_bytes(cand) + _row_tile_bytes(tm, cand, True) <= budget:
                        tf = cand
                        break
        if tf is None:
            tf = hidden        # last resort: keep resident and hope for the best
    assert hidden % tf == 0, "d_ff tile must divide hidden"

    # Keep >=2 row steps on small-VMEM (v7x-like) parts so the "parallel" axis
    # can shard across both TensorCores.  No-op for small M.
    if budget <= (80 << 20) and M >= 512 and pl.cdiv(M, tm) < 2:
        tm = _round_up(pl.cdiv(M, 2), sublane)

    grid_m = pl.cdiv(M, tm)
    K = hidden // tf

    vmem_needed = _weight_bytes(tf) + _row_tile_bytes(tm, tf, K > 1)
    vmem_limit = int(min(budget, max(int(vmem_needed * 1.25) + (2 << 20), 16 << 20)))

    restream = grid_m if K > 1 else 1
    cost = pl.CostEstimate(
        flops=4 * M * hidden * hidden_size,          # two matmuls
        transcendentals=0,
        bytes_accessed=(
            M * hidden_size * (x_isz + o_isz)
            + restream * 2 * hidden * hidden_size * w_isz
            + (hidden + hidden_size) * 4
        ),
    )

    out_shape = jax.ShapeDtypeStruct((M, hidden_size), out_dtype)

    if K == 1:
        out = pl.pallas_call(
            ffn_kernel_resident,
            out_shape=out_shape,
            grid_spec=pltpu.PrefetchScalarGridSpec(
                num_scalar_prefetch=0,
                grid=(grid_m,),
                in_specs=[
                    pl.BlockSpec((tm, hidden_size), lambda i: (i, 0)),
                    pl.BlockSpec((hidden_size, hidden), lambda i: (0, 0)),
                    pl.BlockSpec((1, hidden), lambda i: (0, 0)),
                    pl.BlockSpec((hidden, hidden_size), lambda i: (0, 0)),
                    pl.BlockSpec((1, hidden_size), lambda i: (0, 0)),
                ],
                out_specs=pl.BlockSpec((tm, hidden_size), lambda i: (i, 0)),
            ),
            compiler_params=pltpu.CompilerParams(
                dimension_semantics=("parallel",),
                vmem_limit_bytes=vmem_limit,
            ),
            cost_estimate=cost,
        )(x2d, w1_t, b1_2d, w2_t, b2_2d)
    else:
        out = pl.pallas_call(
            ffn_kernel_tiled,
            out_shape=out_shape,
            grid_spec=pltpu.PrefetchScalarGridSpec(
                num_scalar_prefetch=0,
                grid=(grid_m, K),
                in_specs=[
                    pl.BlockSpec((tm, hidden_size), lambda i, k: (i, 0)),
                    pl.BlockSpec((hidden_size, tf), lambda i, k: (0, k)),
                    pl.BlockSpec((1, tf), lambda i, k: (0, k)),
                    pl.BlockSpec((tf, hidden_size), lambda i, k: (k, 0)),
                    pl.BlockSpec((1, hidden_size), lambda i, k: (0, 0)),
                ],
                out_specs=pl.BlockSpec((tm, hidden_size), lambda i, k: (i, 0)),
                scratch_shapes=[pltpu.VMEM((tm, hidden_size), jnp.float32)],
            ),
            compiler_params=pltpu.CompilerParams(
                dimension_semantics=("parallel", "arbitrary"),
                vmem_limit_bytes=vmem_limit,
            ),
            cost_estimate=cost,
        )(x2d, w1_t, b1_2d, w2_t, b2_2d)

    return out.reshape(batch, seq, hidden_size)


# ---------------------------------------------------------------------------
# Init / self-test
# ---------------------------------------------------------------------------

def init_params(key, hidden_size, hidden):
    """Deterministic init mimicking nn.Linear default (uniform +/- 1/sqrt(fan_in))."""
    k1, k2, k3, k4 = jax.random.split(key, 4)
    bound1 = 1.0 / (hidden_size ** 0.5)
    bound2 = 1.0 / (hidden ** 0.5)
    w1 = jax.random.uniform(k1, (hidden, hidden_size), jnp.float32, -bound1, bound1)
    b1 = jax.random.uniform(k2, (hidden,), jnp.float32, -bound1, bound1)
    w2 = jax.random.uniform(k3, (hidden_size, hidden), jnp.float32, -bound2, bound2)
    b2 = jax.random.uniform(k4, (hidden_size,), jnp.float32, -bound2, bound2)
    return w1, b1, w2, b2


if __name__ == "__main__":
    batch, seq, hidden_size, hidden = 2, 8, 32, 64
    key = jax.random.PRNGKey(0)
    kx, kp = jax.random.split(key)

    x = jax.random.normal(kx, (batch, seq, hidden_size), jnp.float32)
    w1, b1, w2, b2 = init_params(kp, hidden_size, hidden)

    # Plain-JAX reference (dropout = identity in eval mode).
    ref = jnp.maximum(x @ w1.T + b1, 0.0) @ w2.T + b2

    # f32 compute path: tight numerical check.
    p_f32 = prepare_params(w1, b1, w2, b2, compute_dtype=jnp.float32)
    out_f32 = jax.block_until_ready(positionwise_ffn(x, *p_f32))
    assert out_f32.shape == (batch, seq, hidden_size)
    assert jnp.allclose(out_f32, ref, atol=1e-5, rtol=1e-5)

    # bf16 compute path (default / fast): loose check (f32 accumulation inside).
    p_bf16 = prepare_params(w1, b1, w2, b2)   # bf16 weights
    out_bf16 = jax.block_until_ready(positionwise_ffn(x, *p_bf16))
    assert out_bf16.shape == (batch, seq, hidden_size)
    assert jnp.allclose(out_bf16, ref, atol=5e-2, rtol=5e-2)

    # Exercise the d_ff-tiled (K>1) accumulator path explicitly on a bigger
    # hidden that 128 divides, to keep both kernels covered.
    hs2, hid2, M2 = 256, 512, 64
    x2 = jax.random.normal(kx, (2, M2 // 2, hs2), jnp.float32)
    w1b, b1b, w2b, b2b = init_params(kp, hs2, hid2)
    ref2 = jnp.maximum(x2 @ w1b.T + b1b, 0.0) @ w2b.T + b2b
    p2 = prepare_params(w1b, b1b, w2b, b2b, compute_dtype=jnp.float32)
    out2 = jax.block_until_ready(positionwise_ffn(x2, *p2, block_ff=128))
    assert jnp.allclose(out2, ref2, atol=1e-4, rtol=1e-4)

    print("KERNEL_OK")
</pallas_src>

<mosaic_0001>
module attributes {stable_mosaic.version = 11 : i64} {
  func.func @ffn_kernel_resident(%arg0: i32, %arg1: memref<16x32xf32, #tpu.memory_space<vmem>>, %arg2: memref<32x64xf32, #tpu.memory_space<vmem>>, %arg3: memref<1x64xf32, #tpu.memory_space<vmem>>, %arg4: memref<64x32xf32, #tpu.memory_space<vmem>>, %arg5: memref<1x32xf32, #tpu.memory_space<vmem>>, %arg6: memref<16x32xf32, #tpu.memory_space<vmem>>) attributes {dimension_semantics = [#tpu.dimension_semantics<parallel>], iteration_bounds = array<i64: 1>, scalar_prefetch = 0 : i64, scratch_operands = 0 : i64, tpu.core_type = #tpu.core_type<tc>, window_params = [{transform_indices = @transform_0, window_bounds = array<i64: 16, 32>}, {pipeline_mode = #tpu.pipeline_mode<synchronous>, transform_indices = @transform_1, window_bounds = array<i64: 32, 64>}, {pipeline_mode = #tpu.pipeline_mode<synchronous>, transform_indices = @transform_2, window_bounds = array<i64: 1, 64>}, {pipeline_mode = #tpu.pipeline_mode<synchronous>, transform_indices = @transform_3, window_bounds = array<i64: 64, 32>}, {pipeline_mode = #tpu.pipeline_mode<synchronous>, transform_indices = @transform_4, window_bounds = array<i64: 1, 32>}, {transform_indices = @transform_5, window_bounds = array<i64: 16, 32>}]} {
    %c0 = arith.constant 0 : index
    %c0_0 = arith.constant 0 : index
    %0 = vector.load %arg1[%c0, %c0_0] : memref<16x32xf32, #tpu.memory_space<vmem>>, vector<16x32xf32>
    %c0_1 = arith.constant 0 : index
    %c0_2 = arith.constant 0 : index
    %1 = vector.load %arg2[%c0_1, %c0_2] : memref<32x64xf32, #tpu.memory_space<vmem>>, vector<32x64xf32>
    %cst = arith.constant dense<0.000000e+00> : vector<16x64xf32>
    %2 = tpu.matmul %0, %1, %cst {dimension_numbers = #tpu.dot_dimension_numbers<[1], [0], [0], [1], [0, 0, 1, 1], [], []>} : vector<16x32xf32>, vector<32x64xf32>, vector<16x64xf32> -> vector<16x64xf32>
    %c0_3 = arith.constant 0 : index
    %c0_4 = arith.constant 0 : index
    %3 = vector.load %arg3[%c0_3, %c0_4] : memref<1x64xf32, #tpu.memory_space<vmem>>, vector<1x64xf32>
    %4 = vector.broadcast %3 : vector<1x64xf32> to vector<16x64xf32>
    %5 = arith.addf %2, %4 : vector<16x64xf32>
    %cst_5 = arith.constant 0.000000e+00 : f32
    %6 = vector.broadcast %cst_5 : f32 to vector<16x64xf32>
    %7 = arith.maximumf %5, %6 : vector<16x64xf32>
    %c0_6 = arith.constant 0 : index
    %c0_7 = arith.constant 0 : index
    %8 = vector.load %arg4[%c0_6, %c0_7] : memref<64x32xf32, #tpu.memory_space<vmem>>, vector<64x32xf32>
    %cst_8 = arith.constant dense<0.000000e+00> : vector<16x32xf32>
    %9 = tpu.matmul %7, %8, %cst_8 {dimension_numbers = #tpu.dot_dimension_numbers<[1], [0], [0], [1], [0, 0, 1, 1], [], []>} : vector<16x64xf32>, vector<64x32xf32>, vector<16x32xf32> -> vector<16x32xf32>
    %c0_9 = arith.constant 0 : index
    %c0_10 = arith.constant 0 : index
    %10 = vector.load %arg5[%c0_9, %c0_10] : memref<1x32xf32, #tpu.memory_space<vmem>>, vector<1x32xf32>
    %11 = vector.broadcast %10 : vector<1x32xf32> to vector<16x32xf32>
    %12 = arith.addf %9, %11 : vector<16x32xf32>
    %c0_11 = arith.constant 0 : index
    %c0_12 = arith.constant 0 : index
    %13 = vector.load %arg6[%c0_11, %c0_12] : memref<16x32xf32, #tpu.memory_space<vmem>>, vector<16x32xf32>
    tpu.vector_store %arg6[%c0_11, %c0_12], %12 {strides = array<i32>} : memref<16x32xf32, #tpu.memory_space<vmem>>, vector<16x32xf32>,
    return
  }
  func.func @transform_0(%arg0: i32) -> (i32, i32) {
    %c0_i32 = arith.constant 0 : i32
    %c0_i32_0 = arith.constant 0 : i32
    return %arg0, %c0_i32 : i32, i32
  }
  func.func @transform_1(%arg0: i32) -> (i32, i32) {
    %c0_i32 = arith.constant 0 : i32
    %c0_i32_0 = arith.constant 0 : i32
    %c0_i32_1 = arith.constant 0 : i32
    return %c0_i32, %c0_i32_0 : i32, i32
  }
  func.func @transform_2(%arg0: i32) -> (i32, i32) {
    %c0_i32 = arith.constant 0 : i32
    %c0_i32_0 = arith.constant 0 : i32
    %c0_i32_1 = arith.constant 0 : i32
    return %c0_i32, %c0_i32_0 : i32, i32
  }
  func.func @transform_3(%arg0: i32) -> (i32, i32) {
    %c0_i32 = arith.constant 0 : i32
    %c0_i32_0 = arith.constant 0 : i32
    %c0_i32_1 = arith.constant 0 : i32
    return %c0_i32, %c0_i32_0 : i32, i32
  }
  func.func @transform_4(%arg0: i32) -> (i32, i32) {
    %c0_i32 = arith.constant 0 : i32
    %c0_i32_0 = arith.constant 0 : i32
    %c0_i32_1 = arith.constant 0 : i32
    return %c0_i32, %c0_i32_0 : i32, i32
  }
  func.func @transform_5(%arg0: i32) -> (i32, i32) {
    %c0_i32 = arith.constant 0 : i32
    %c0_i32_0 = arith.constant 0 : i32
    return %arg0, %c0_i32 : i32, i32
  }
}

</mosaic_0001>

<llo_original>
// kernel: positionwise_ffn.1
$region0: #{positionwise_ffn.1}
  #allocation0 [shape = 'u32[]', space=smem, size = 0x4, offset = 0x4, fixed_abs, tag = 'smem constant byte address 0x4 - core index']
  #allocation1 [shape = 'u32[144,128]{1,0:T(1,128)}', space=vmem, size = 0x12000, scoped, tag = 'internal scratch']
  %s0 = inlined_call_operand.vmem [shape: f32[16,32], index: 0, kind: input, shape index: {}]
  %s1 = inlined_call_operand.vmem [shape: f32[32,64], index: 1, kind: input, shape index: {}]
  %s2 = inlined_call_operand.vmem [shape: f32[1,64], index: 2, kind: input, shape index: {}]
  %s3 = inlined_call_operand.vmem [shape: f32[64,32], index: 3, kind: input, shape index: {}]
  %s4 = inlined_call_operand.vmem [shape: f32[1,32], index: 4, kind: input, shape index: {}]
  %s5 = inlined_call_operand.hbm [shape: f32[16,32], index: 5, kind: output, shape index: {}]
  %s6 = sld [smem:[#allocation0]]
  $region30: #{positionwise_ffn.1} parent=0
    _
  %s8 = ssub.s32 1, %s6
  %s9 = scalar_select 0, %s8, %s6
  $region1: #{positionwise_ffn.1} parent=0
    #allocation2 [shape = 'u8[8192]{0}', space=vmem, size = 0x2000, scoped, tag = 'output window, operand 0, single buffered']
    #allocation3 [shape = 's32[1]{0}', space=sflag, size = 0x4, scoped, tag = 'scoped memory for positionwise_ffn.1']
    %10 = vsyncpa [#allocation3], 0
    // Predicated region
    $region2: #{positionwise_ffn.1} parent=1 // pred_check
      _
    $region3: #{positionwise_ffn.1} parent=1 // pred_check_branch
      %12 = sbr.rel (0) target = $region5
    $region4: #{positionwise_ffn.1} parent=1 // pred_region
      _
    $region5: #{positionwise_ffn.1} parent=1 // pred_fallthru
      _
    // Predicated region
    $region6: #{positionwise_ffn.1} parent=1 // pred_check
      _
    $region7: #{positionwise_ffn.1} parent=1 // pred_check_branch
      %14 = sbr.rel (0) target = $region9
    $region8: #{positionwise_ffn.1} parent=1 // pred_region
      _
    $region9: #{positionwise_ffn.1} parent=1 // pred_fallthru
      _
    // Predicated region
    $region10: #{positionwise_ffn.1} parent=1 // pred_check
      _
    $region11: #{positionwise_ffn.1} parent=1 // pred_check_branch
      %16 = sbr.rel (0) target = $region13
    $region12: #{positionwise_ffn.1} parent=1 // pred_region
      _
    $region13: #{positionwise_ffn.1} parent=1 // pred_fallthru
      _
    // Predicated region
    $region14: #{positionwise_ffn.1} parent=1 // pred_check
      _
    $region15: #{positionwise_ffn.1} parent=1 // pred_check_branch
      %18 = sbr.rel (0) target = $region17
    $region16: #{positionwise_ffn.1} parent=1 // pred_region
      _
    $region17: #{positionwise_ffn.1} parent=1 // pred_fallthru
      _
    // Predicated region
    $region18: #{positionwise_ffn.1} parent=1 // pred_check
      _
    $region19: #{positionwise_ffn.1} parent=1 // pred_check_branch
      %20 = sbr.rel (0) target = $region21
    $region20: #{positionwise_ffn.1} parent=1 // pred_region
      _
    $region21: #{positionwise_ffn.1} parent=1 // pred_fallthru
      _
    %v21 = vld [vmem:[%s0] sm:$0xff]
    %v22 = vld [vmem:[%s0 + $0x8] sm:$0xff]
    %v23 = vld [vmem:[%s1] sm:$0xff]
    %v24 = vld [vmem:[%s1 + $0x8] sm:$0xff]
    %v25 = vld [vmem:[%s1 + $0x10] sm:$0xff]
    %v26 = vld [vmem:[%s1 + $0x18] sm:$0xff]
    %v27 = vld [vmem:[%s2] sm:$0x1]
    %v29 = vlaneseq
    %v30 = vshrl.u32 %v29, 7
    %v31 = vsub.s32 0, %v30
    %v32 = vrot.slane %v27, %v31
    %vm34 = vcmask 261120
    %v36 = vsel %vm34, %v21, 0
    %v39 = vsel %vm34, %v22, 0
    %41 = vmatprep.subr.mxu0 0.0
    %42 = vmatpush1.msra.mxu0 %v23
    %43 = vmatprep.subr.mxu0 0.0
    %44 = vmatpush1.msra.mxu0 %v24
    %45 = vmatprep.subr.mxu0 0.0
    %46 = vmatpush1.msra.mxu0 %v25
    %47 = vmatprep.subr.mxu0 0.0
    %48 = vmatpush1.msra.mxu0 %v26
    %49 = vmatprep.subr.mxu0 0.0
    %50 = vmatpush1.msra.mxu0 0.0
    %51 = vmatprep.subr.mxu0 0.0
    %52 = vmatpush1.msra.mxu0 0.0
    %53 = vmatprep.subr.mxu0 0.0
    %54 = vmatpush1.msra.mxu0 0.0
    %55 = vmatprep.subr.mxu0 0.0
    %56 = vmatpush1.msra.mxu0 0.0
    %57 = vmatprep.subr.mxu0 0.0
    %58 = vmatpush1.msra.mxu0 0.0
    %59 = vmatprep.subr.mxu0 0.0
    %60 = vmatpush1.msra.mxu0 0.0
    %61 = vmatprep.subr.mxu0 0.0
    %62 = vmatpush1.msra.mxu0 0.0
    %63 = vmatprep.subr.mxu0 0.0
    %64 = vmatpush1.msra.mxu0 0.0
    %65 = vmatprep.subr.mxu0 0.0
    %66 = vmatpush1.msra.mxu0 0.0
    %67 = vmatprep.subr.mxu0 0.0
    %68 = vmatpush1.msra.mxu0 0.0
    %69 = vmatprep.subr.mxu0 0.0
    %70 = vmatpush1.msra.mxu0 0.0
    %71 = vmatprep.subr.mxu0 0.0
    %72 = vmatpush1.msra.mxu0 0.0
    %73 = vmatprep.subr.mxu0 0.0
    %74 = vmatpush1.msra.mxu0 0.0
    %75 = vmatprep.subr.mxu0 0.0
    %76 = vmatpush1.msra.mxu0 0.0
    %77 = vmatprep.subr.mxu0 0.0
    %78 = vmatpush1.msra.mxu0 0.0
    %79 = vmatprep.subr.mxu0 0.0
    %80 = vmatpush1.msra.mxu0 0.0
    %81 = vmatprep.subr.mxu0 0.0
    %82 = vmatpush1.msra.mxu0 0.0
    %83 = vmatprep.subr.mxu0 0.0
    %84 = vmatpush1.msra.mxu0 0.0
    %85 = vmatprep.subr.mxu0 0.0
    %86 = vmatpush1.msra.mxu0 0.0
    %87 = vmatprep.subr.mxu0 0.0
    %88 = vmatpush1.msra.mxu0 0.0
    %89 = vmatprep.subr.mxu0 0.0
    %90 = vmatpush1.msra.mxu0 0.0
    %91 = vmatprep.subr.mxu0 0.0
    %92 = vmatpush1.msra.mxu0 0.0
    %93 = vmatprep.subr.mxu0 0.0
    %94 = vmatpush1.msra.mxu0 0.0
    %95 = vmatprep.subr.mxu0 0.0
    %96 = vmatpush1.msra.mxu0 0.0
    %97 = vmatprep.subr.mxu0 0.0
    %98 = vmatpush1.msra.mxu0 0.0
    %99 = vmatprep.subr.mxu0 0.0
    %100 = vmatpush1.msra.mxu0 0.0
    %101 = vmatprep.subr.mxu0 0.0
    %102 = vmatpush1.msra.mxu0 0.0
    %103 = vmatprep.subr.mxu0 0.0
    %104 = vmatpush1.msra.mxu0 0.0
    %105 = vmatprep.mubr.f32.mxu0 0.0
    %106 = vmatmul.mubr.f32.gmra.mrb[0].mxu0 %v36
    %v107 = vpop.f32.mrb[0].mxu0
    %v108 = vadd.f32 %v32, %v107
    %v109 = vpop.f32.mrb[0].mxu0
    %110 = vmatprep.mubr.f32.mxu0 0.0
    %111 = vmatmul.mubr.f32.gmra.mrb[0].mxu0 %v39
    %v112 = vpop.f32.mrb[0].mxu0
    %v113 = vadd.f32 %v32, %v112
    %v114 = vpop.f32.mrb[0].mxu0
    %115 = vdwg.mxu0
    %v116 = vmax.f32 %v108, 0.0
    %v117 = vmax.f32 %v113, 0.0
    %v118 = vld [vmem:[%s3] sm:$0xff]
    %v119 = vld [vmem:[%s3 + $0x8] sm:$0xff]
    %v120 = vld [vmem:[%s3 + $0x10] sm:$0xff]
    %v121 = vld [vmem:[%s3 + $0x18] sm:$0xff]
    %v122 = vld [vmem:[%s3 + $0x20] sm:$0xff]
    %v123 = vld [vmem:[%s3 + $0x28] sm:$0xff]
    %v124 = vld [vmem:[%s3 + $0x30] sm:$0xff]
    %v125 = vld [vmem:[%s3 + $0x38] sm:$0xff]
    %v126 = vld [vmem:[%s4] sm:$0x1]
    %v128 = vlaneseq
    %v129 = vshrl.u32 %v128, 7
    %v130 = vsub.s32 0, %v129
    %v131 = vrot.slane %v126, %v130
    %vm133 = vcmask 523264
    %v135 = vsel %vm133, %v116, 0
    %v138 = vsel %vm133, %v117, 0
    %140 = vmatprep.subr.mxu0 0.0
    %141 = vmatpush1.msra.mxu0 %v118
    %142 = vmatprep.subr.mxu0 0.0
    %143 = vmatpush1.msra.mxu0 %v119
    %144 = vmatprep.subr.mxu0 0.0
    %145 = vmatpush1.msra.mxu0 %v120
    %146 = vmatprep.subr.mxu0 0.0
    %147 = vmatpush1.msra.mxu0 %v121
    %148 = vmatprep.subr.mxu0 0.0
    %149 = vmatpush1.msra.mxu0 %v122
    %150 = vmatprep.subr.mxu0 0.0
    %151 = vmatpush1.msra.mxu0 %v123
    %152 = vmatprep.subr.mxu0 0.0
    %153 = vmatpush1.msra.mxu0 %v124
    %154 = vmatprep.subr.mxu0 0.0
    %155 = vmatpush1.msra.mxu0 %v125
    %156 = vmatprep.subr.mxu0 0.0
    %157 = vmatpush1.msra.mxu0 0.0
    %158 = vmatprep.subr.mxu0 0.0
    %159 = vmatpush1.msra.mxu0 0.0
    %160 = vmatprep.subr.mxu0 0.0
    %161 = vmatpush1.msra.mxu0 0.0
    %162 = vmatprep.subr.mxu0 0.0
    %163 = vmatpush1.msra.mxu0 0.0
    %164 = vmatprep.subr.mxu0 0.0
    %165 = vmatpush1.msra.mxu0 0.0
    %166 = vmatprep.subr.mxu0 0.0
    %167 = vmatpush1.msra.mxu0 0.0
    %168 = vmatprep.subr.mxu0 0.0
    %169 = vmatpush1.msra.mxu0 0.0
    %170 = vmatprep.subr.mxu0 0.0
    %171 = vmatpush1.msra.mxu0 0.0
    %172 = vmatprep.subr.mxu0 0.0
    %173 = vmatpush1.msra.mxu0 0.0
    %174 = vmatprep.subr.mxu0 0.0
    %175 = vmatpush1.msra.mxu0 0.0
    %176 = vmatprep.subr.mxu0 0.0
    %177 = vmatpush1.msra.mxu0 0.0
    %178 = vmatprep.subr.mxu0 0.0
    %179 = vmatpush1.msra.mxu0 0.0
    %180 = vmatprep.subr.mxu0 0.0
    %181 = vmatpush1.msra.mxu0 0.0
    %182 = vmatprep.subr.mxu0 0.0
    %183 = vmatpush1.msra.mxu0 0.0
    %184 = vmatprep.subr.mxu0 0.0
    %185 = vmatpush1.msra.mxu0 0.0
    %186 = vmatprep.subr.mxu0 0.0
    %187 = vmatpush1.msra.mxu0 0.0
    %188 = vmatprep.subr.mxu0 0.0
    %189 = vmatpush1.msra.mxu0 0.0
    %190 = vmatprep.subr.mxu0 0.0
    %191 = vmatpush1.msra.mxu0 0.0
    %192 = vmatprep.subr.mxu0 0.0
    %193 = vmatpush1.msra.mxu0 0.0
    %194 = vmatprep.subr.mxu0 0.0
    %195 = vmatpush1.msra.mxu0 0.0
    %196 = vmatprep.subr.mxu0 0.0
    %197 = vmatpush1.msra.mxu0 0.0
    %198 = vmatprep.subr.mxu0 0.0
    %199 = vmatpush1.msra.mxu0 0.0
    %200 = vmatprep.subr.mxu0 0.0
    %201 = vmatpush1.msra.mxu0 0.0
    %202 = vmatprep.subr.mxu0 0.0
    %203 = vmatpush1.msra.mxu0 0.0
    %204 = vmatprep.mubr.f32.mxu0 0.0
    %205 = vmatmul.mubr.f32.gmra.mrb[0].mxu0 %v135
    %v206 = vpop.f32.mrb[0].mxu0
    %v207 = vadd.f32 %v131, %v206
    %v208 = vpop.f32.mrb[0].mxu0
    %209 = vmatprep.mubr.f32.mxu0 0.0
    %210 = vmatmul.mubr.f32.gmra.mrb[0].mxu0 %v138
    %v211 = vpop.f32.mrb[0].mxu0
    %v212 = vadd.f32 %v131, %v211
    %v213 = vpop.f32.mrb[0].mxu0
    %214 = vdwg.mxu0
    %215 = vst.msk [vmem:[#allocation2] sm:$0xff] %vm34, %v207
    %216 = vst.msk [vmem:[#allocation2 + $0x8] sm:$0xff] %vm34, %v212
    // Predicated region
    $region22: #{positionwise_ffn.1} parent=1 // pred_check
      _
    $region23: #{positionwise_ffn.1} parent=1 // pred_check_branch
      %218 = sbr.rel (0) target = $region25
    $region24: #{positionwise_ffn.1} parent=1 // pred_region
      %s220 = ssub.s32 256, 256
      %221 = vsyncadd [#allocation3], %s220
      %s222 = sshll.u32 [#allocation2], 4
      %s223 = int_to_ptr.vmem [resolvable:$true] %s222
      %228 = dma.vmem_to_hbm [thread:$0]  %s223, 256, %s5, [#allocation3], 128, 128, 8
    $region25: #{positionwise_ffn.1} parent=1 // pred_fallthru
      _
    // Predicated region
    $region26: #{positionwise_ffn.1} parent=1 // pred_check
      _
    $region27: #{positionwise_ffn.1} parent=1 // pred_check_branch
      %230 = sbr.rel (0) target = $region29
    $region28: #{positionwise_ffn.1} parent=1 // pred_region
      %231 = dma.done [#allocation3], 256
    $region29: #{positionwise_ffn.1} parent=1 // pred_fallthru
      _
    %232 = vsyncpa [#allocation3], 1

</llo_original>
